<compile_context>
chip_gen: v5e
topology: v5e:2x2
jax: 0.10.0
libtpu: 0.0.40
codegen_flags: <defaults>
</compile_context>

<pallas_src>
import jax
import jax.numpy as jnp
import numpy as np
from jax.experimental import pallas as pl
from jax.experimental.pallas import tpu as pltpu


def _make_kernel(s_valid, with_mask):
    """Build the kernel body. `s_valid` is the un-padded sequence length."""

    def kernel(*refs):
        if with_mask:
            x_ref, w1_ref, b1_ref, w2_ref, mask_ref, out_ref = refs
        else:
            x_ref, w1_ref, b1_ref, w2_ref, out_ref = refs
        bt, s, d = x_ref.shape

        # --- ws1: one large-M 2-D MXU matmul on the flattened (Bt*S, D) block.
        # S is padded to the sublane packing in the wrapper, so this reshape is
        # a free relayout (no extra VMEM copy).
        x2d = x_ref[...].reshape(bt * s, d)
        w1 = w1_ref[...]
        if x2d.dtype != w1.dtype:               # optional bf16 MXU operands
            x2d = x2d.astype(w1.dtype)
        pre = jax.lax.dot_general(               # x @ W1^T (nn.Linear layout, no transpose)
            x2d, w1,
            dimension_numbers=(((1,), (1,)), ((), ())),
            preferred_element_type=jnp.float32,
        )                                        # (Bt*S, D) f32
        h = jnp.tanh(pre + b1_ref[...])          # bias (1, D) broadcasts; f32

        # --- ws2 (output width 1): VPU multiply + lane (XLU) reduce, off the MXU.
        scores = jnp.sum(h.reshape(bt, s, d) * w2_ref[...], axis=-1)   # (Bt, S) f32

        # --- additive context mask: -10000 where mask == 0 (torch semantics).
        if with_mask:
            scores = scores + jnp.where(mask_ref[...] == 0.0, -10000.0, 0.0)
        # --- exclude wrapper-side S padding from the softmax.
        if s_valid < s:
            col = jax.lax.broadcasted_iota(jnp.int32, (bt, s), 1)
            scores = jnp.where(col < s_valid, scores, -1e30)

        # --- softmax over the sequence (lane) axis, f32 accumulation.
        m = jnp.max(scores, axis=-1, keepdims=True)
        e = jnp.exp(scores - m)
        denom = jnp.sum(e, axis=-1, keepdims=True)
        # Exact reciprocal keeps tight parity with the torch/jax reference.
        out_ref[...] = (e * pl.reciprocal(denom, approx=False)).astype(out_ref.dtype)

    return kernel


def _vmem_capacity_bytes():
    try:
        cap = getattr(pltpu.get_tpu_info(), "vmem_capacity_bytes", None)
        if cap:
            return int(cap)
    except Exception:
        pass
    return 64 * 1024 * 1024          # v7x per-TC physical VMEM (smallest fleet-wide)


def _pick_batch_block(batch, seq_pad, dim, x_itemsize, block_budget, with_mask):
    # Per batch row of one block (bytes):
    #   x tile (double-buffered input)       : 2 * S * D * itemsize
    #   live f32 temporaries (pre/h, h*w2)   : 2 * S * D * 4
    #   mask + out blocks (double-buffered)  : (2 or 4) * S * 4
    per_row = seq_pad * dim * (2 * x_itemsize + 2 * 4)
    per_row += (4 if with_mask else 2) * seq_pad * 4
    bt_budget = max(1, block_budget // max(per_row, 1))

    if batch <= 8:
        # The (Bt, S) mask/out blocks need Bt == B or a multiple of 8, so tiny
        # batches use a single full-extent block.
        return batch
    if bt_budget < 8:
        # TODO(synk): add an S-axis "arbitrary" grid dim with a two-pass
        # softmax when even an 8-row batch tile exceeds the VMEM budget.
        return 8

    bt_budget = (bt_budget // 8) * 8
    # Target >= 4 grid steps: hides the x DMA behind compute on every chip and
    # lets dimension_semantics=("parallel",) shard across both v7x TensorCores.
    bt_target = ((-(-batch // 4)) + 7) // 8 * 8
    bt = max(8, min(bt_budget, bt_target))

    # Prefer an even number of grid steps (2 TCs on v7x) when it costs nothing.
    steps = -(-batch // bt)
    if steps > 1 and steps % 2 == 1:
        bt_alt = ((-(-batch // (steps + 1))) + 7) // 8 * 8
        if 8 <= bt_alt <= bt_budget and (-(-batch // bt_alt)) % 2 == 0:
            bt = bt_alt
    return int(bt)


def additive_self_attention(hidden_embeds, w1, b1, w2, context_mask=None,
                            *, batch_block=None, use_bf16_matmul=None):
    """Eval-mode forward of AdditiveSelfAttention.

    hidden_embeds: (B, S, D) or (S, D)   (f32 or bf16)
    w1: (D, D)  = nn.Linear(D, D).weight       b1: (D,) bias
    w2: (1, D)  = nn.Linear(D, 1, bias=False).weight
    context_mask: optional (B, S) 0/1 mask
    Returns (B, 1, S) float32 attention weights.
    """
    # TODO(synk): training-mode dropout (stateful RNG masks) not implemented.
    if hidden_embeds.ndim == 2:                  # torch's unsqueeze(0) path
        hidden_embeds = hidden_embeds[None]
        if context_mask is not None and context_mask.ndim == 1:
            context_mask = context_mask[None]
    x = hidden_embeds
    B, S, D = x.shape

    # MXU operand dtype: bf16 when the input is bf16, or (optionally) for f32
    # inputs with large D where an f32 matmul becomes MXU-bound on v6e/v7x.
    if use_bf16_matmul is None:
        use_bf16_matmul = bool(x.dtype == jnp.float32 and D >= 256)
    mxu_dtype = jnp.bfloat16 if (x.dtype == jnp.bfloat16 or use_bf16_matmul) else x.dtype
    w1_op = jnp.asarray(w1).astype(mxu_dtype)
    b1_row = jnp.asarray(b1, jnp.float32).reshape(1, D)
    w2_row = jnp.asarray(w2, jnp.float32).reshape(1, D)

    with_mask = context_mask is not None
    mask = jnp.asarray(context_mask, jnp.float32) if with_mask else None

    # Pad S to the sublane packing so the in-kernel flatten is free; padded
    # columns are masked out of the softmax in-kernel and sliced off below.
    sub = 16 if x.dtype == jnp.bfloat16 else 8
    S_pad = -(-S // sub) * sub
    if S_pad != S:
        x = jnp.pad(x, ((0, 0), (0, S_pad - S), (0, 0)))
        if with_mask:
            mask = jnp.pad(mask, ((0, 0), (0, S_pad - S)))

    # --- VMEM budget: derived from the chip, not a fixed heuristic. ---
    vmem_cap = _vmem_capacity_bytes()
    vmem_limit = int(min(vmem_cap * 3 // 4, 96 * 1024 * 1024))
    w1_bytes = D * D * jnp.dtype(mxu_dtype).itemsize
    # Count W1 twice in case single-buffering (pl.Buffered(1)) is unavailable.
    block_budget = max(vmem_limit - 2 * w1_bytes - 2 * 1024 * 1024, 4 * 1024 * 1024)

    if batch_block is None:
        Bt = _pick_batch_block(B, S_pad, D, x.dtype.itemsize, block_budget, with_mask)
    else:
        Bt = min(int(batch_block), B)
    grid = (pl.cdiv(B, Bt),)

    kernel = _make_kernel(S, with_mask)
    operands = [x, w1_op, b1_row, w2_row] + ([mask] if with_mask else [])

    mask_bytes = B * S_pad * 4 if with_mask else 0
    cost = pl.CostEstimate(
        flops=2 * B * S_pad * D * D + 2 * B * S_pad * D,
        transcendentals=B * S_pad * (D + 1),
        bytes_accessed=(x.size * x.dtype.itemsize
                        + w1_op.size * jnp.dtype(mxu_dtype).itemsize
                        + 8 * D + mask_bytes + B * S_pad * 4),
    )
    compiler_params = pltpu.CompilerParams(
        dimension_semantics=("parallel",),       # batch grid -> both TCs on v7x
        vmem_limit_bytes=vmem_limit,
    )

    def build_and_run(single_buffer_weights):
        if single_buffer_weights:
            def wspec(shape):
                return pl.BlockSpec(shape, lambda i: (0, 0),
                                    pipeline_mode=pl.Buffered(1))
        else:
            def wspec(shape):
                return pl.BlockSpec(shape, lambda i: (0, 0))
        in_specs = [
            pl.BlockSpec((Bt, S_pad, D), lambda i: (i, 0, 0)),   # x: streamed per batch tile
            wspec((D, D)),                                        # W1: resident across grid
            wspec((1, D)),                                        # b1: resident
            wspec((1, D)),                                        # w2 row: resident
        ]
        if with_mask:
            in_specs.append(pl.BlockSpec((Bt, S_pad), lambda i: (i, 0)))
        return pl.pallas_call(
            kernel,
            out_shape=jax.ShapeDtypeStruct((B, S_pad), jnp.float32),
            grid=grid,
            in_specs=in_specs,
            out_specs=pl.BlockSpec((Bt, S_pad), lambda i: (i, 0)),  # lane-dense output
            compiler_params=compiler_params,
            cost_estimate=cost,
        )(*operands)

    try:
        attn2d = build_and_run(True)
    except Exception:
        # pipeline_mode=pl.Buffered(1) unavailable on this JAX version; fall
        # back to default (double-buffered) specs for the resident weights.
        attn2d = build_and_run(False)

    if S_pad != S:
        attn2d = attn2d[:, :S]
    return attn2d[:, None, :]                    # (B, 1, S) unsqueeze in wrapper


def _xavier_uniform(key, shape):
    fan_out, fan_in = shape
    bound = float(np.sqrt(6.0 / (fan_in + fan_out)))
    return jax.random.uniform(key, shape, jnp.float32, -bound, bound)


def _reference(x, w1, b1, w2, mask=None):
    x = x.astype(jnp.float32)
    h = jnp.tanh(jnp.einsum("bsd,ed->bse", x, jnp.asarray(w1, jnp.float32))
                 + jnp.asarray(b1, jnp.float32))
    s = jnp.einsum("bsd,od->bso", h, jnp.asarray(w2, jnp.float32))[..., 0]
    if mask is not None:
        s = s + (-10000.0) * (jnp.asarray(mask, jnp.float32) == 0).astype(jnp.float32)
    return jax.nn.softmax(s, axis=1)[:, None, :]


if __name__ == "__main__":
    key = jax.random.PRNGKey(0)
    B, S, D = 4, 8, 128

    k_x, k_w1, k_w2 = jax.random.split(key, 3)
    x = jax.random.normal(k_x, (B, S, D), jnp.float32)
    w1 = _xavier_uniform(k_w1, (D, D))            # nn.Linear(D, D).weight
    b1 = jnp.zeros((D,), jnp.float32)             # bias filled with 0
    w2 = _xavier_uniform(k_w2, (1, D))            # nn.Linear(D, 1, bias=False).weight
    mask = jnp.array(
        [[1, 1, 1, 1, 1, 1, 1, 1],
         [1, 1, 1, 1, 1, 0, 0, 0],
         [1, 1, 1, 1, 1, 1, 1, 1],
         [0, 1, 1, 1, 1, 1, 1, 1]], dtype=jnp.float32)

    # f32 path, with mask
    out = jax.block_until_ready(additive_self_attention(x, w1, b1, w2, mask))
    assert out.shape == (B, 1, S), out.shape
    ref = _reference(x, w1, b1, w2, mask)
    np.testing.assert_allclose(np.asarray(out), np.asarray(ref), rtol=1e-4, atol=1e-5)

    # f32 path, no mask (specialized no-mask kernel variant)
    out_nm = jax.block_until_ready(additive_self_attention(x, w1, b1, w2))
    ref_nm = _reference(x, w1, b1, w2)
    np.testing.assert_allclose(np.asarray(out_nm), np.asarray(ref_nm), rtol=1e-4, atol=1e-5)

    # bf16 inputs: bf16 MXU operands, f32 accumulation; S padded 8 -> 16 internally.
    out_bf16 = jax.block_until_ready(
        additive_self_attention(x.astype(jnp.bfloat16), w1, b1, w2, mask))
    assert out_bf16.shape == (B, 1, S), out_bf16.shape
    assert bool(jnp.all(jnp.isfinite(out_bf16)))
    np.testing.assert_allclose(np.asarray(jnp.sum(out_bf16, axis=-1)),
                               np.ones((B, 1), np.float32), rtol=1e-3, atol=1e-3)

    print("KERNEL_OK")
</pallas_src>

<mosaic_0001>
module attributes {stable_mosaic.version = 11 : i64} {
  func.func @kernel(%arg0: i32, %arg1: memref<4x8x128xf32, #tpu.memory_space<vmem>>, %arg2: memref<128x128xf32, #tpu.memory_space<vmem>>, %arg3: memref<1x128xf32, #tpu.memory_space<vmem>>, %arg4: memref<1x128xf32, #tpu.memory_space<vmem>>, %arg5: memref<4x8xf32, #tpu.memory_space<vmem>>, %arg6: memref<4x8xf32, #tpu.memory_space<vmem>>) attributes {dimension_semantics = [#tpu.dimension_semantics<parallel>], iteration_bounds = array<i64: 1>, scalar_prefetch = 0 : i64, scratch_operands = 0 : i64, tpu.core_type = #tpu.core_type<tc>, window_params = [{transform_indices = @transform_0, window_bounds = array<i64: 4, 8, 128>}, {pipeline_mode = #tpu.pipeline_mode<synchronous>, transform_indices = @transform_1, window_bounds = array<i64: 128, 128>}, {pipeline_mode = #tpu.pipeline_mode<synchronous>, transform_indices = @transform_2, window_bounds = array<i64: 1, 128>}, {pipeline_mode = #tpu.pipeline_mode<synchronous>, transform_indices = @transform_3, window_bounds = array<i64: 1, 128>}, {transform_indices = @transform_4, window_bounds = array<i64: 4, 8>}, {transform_indices = @transform_5, window_bounds = array<i64: 4, 8>}]} {
    %c0 = arith.constant 0 : index
    %c0_0 = arith.constant 0 : index
    %c0_1 = arith.constant 0 : index
    %0 = vector.load %arg1[%c0, %c0_0, %c0_1] : memref<4x8x128xf32, #tpu.memory_space<vmem>>, vector<4x8x128xf32>
    %1 = vector.shape_cast %0 : vector<4x8x128xf32> to vector<32x128xf32>
    %c0_2 = arith.constant 0 : index
    %c0_3 = arith.constant 0 : index
    %2 = vector.load %arg2[%c0_2, %c0_3] : memref<128x128xf32, #tpu.memory_space<vmem>>, vector<128x128xf32>
    %cst = arith.constant dense<0.000000e+00> : vector<32x128xf32>
    %3 = tpu.matmul %1, %2, %cst {dimension_numbers = #tpu.dot_dimension_numbers<[1], [1], [0], [0], [0, 0, 1, 0], [], []>} : vector<32x128xf32>, vector<128x128xf32>, vector<32x128xf32> -> vector<32x128xf32>
    %c0_4 = arith.constant 0 : index
    %c0_5 = arith.constant 0 : index
    %4 = vector.load %arg3[%c0_4, %c0_5] : memref<1x128xf32, #tpu.memory_space<vmem>>, vector<1x128xf32>
    %5 = vector.broadcast %4 : vector<1x128xf32> to vector<32x128xf32>
    %6 = arith.addf %3, %5 : vector<32x128xf32>
    %7 = math.tanh %6 : vector<32x128xf32>
    %8 = vector.shape_cast %7 : vector<32x128xf32> to vector<4x8x128xf32>
    %c0_6 = arith.constant 0 : index
    %c0_7 = arith.constant 0 : index
    %9 = vector.load %arg4[%c0_6, %c0_7] : memref<1x128xf32, #tpu.memory_space<vmem>>, vector<1x128xf32>
    %10 = vector.shape_cast %9 : vector<1x128xf32> to vector<1x1x128xf32>
    %11 = vector.broadcast %10 : vector<1x1x128xf32> to vector<4x8x128xf32>
    %12 = arith.mulf %8, %11 : vector<4x8x128xf32>
    %cst_8 = arith.constant dense<0.000000e+00> : vector<4x8xf32>
    %13 = vector.multi_reduction <add>, %12, %cst_8 [2] : vector<4x8x128xf32> to vector<4x8xf32>
    %c0_9 = arith.constant 0 : index
    %c0_10 = arith.constant 0 : index
    %14 = vector.load %arg5[%c0_9, %c0_10] : memref<4x8xf32, #tpu.memory_space<vmem>>, vector<4x8xf32>
    %cst_11 = arith.constant 0.000000e+00 : f32
    %15 = vector.broadcast %cst_11 : f32 to vector<4x8xf32>
    %16 = arith.cmpf oeq, %14, %15 : vector<4x8xf32>
    %cst_12 = arith.constant -1.000000e+04 : f32
    %cst_13 = arith.constant 0.000000e+00 : f32
    %17 = vector.broadcast %cst_12 : f32 to vector<4x8xf32>
    %18 = vector.broadcast %cst_13 : f32 to vector<4x8xf32>
    %19 = arith.select %16, %17, %18 : vector<4x8xi1>, vector<4x8xf32>
    %20 = arith.addf %13, %19 : vector<4x8xf32>
    %cst_14 = arith.constant dense<0xFF800000> : vector<4xf32>
    %21 = vector.multi_reduction <maximumf>, %20, %cst_14 [1] : vector<4x8xf32> to vector<4xf32>
    %22 = vector.shape_cast %21 : vector<4xf32> to vector<4x1xf32>
    %23 = vector.broadcast %22 : vector<4x1xf32> to vector<4x8xf32>
    %24 = arith.subf %20, %23 : vector<4x8xf32>
    %25 = math.exp %24 : vector<4x8xf32>
    %cst_15 = arith.constant dense<0.000000e+00> : vector<4xf32>
    %26 = vector.multi_reduction <add>, %25, %cst_15 [1] : vector<4x8xf32> to vector<4xf32>
    %27 = vector.shape_cast %26 : vector<4xf32> to vector<4x1xf32>
    %28 = tpu.reciprocal %27 : vector<4x1xf32> -> vector<4x1xf32>
    %29 = vector.broadcast %28 : vector<4x1xf32> to vector<4x8xf32>
    %30 = arith.mulf %25, %29 : vector<4x8xf32>
    %c0_16 = arith.constant 0 : index
    %c0_17 = arith.constant 0 : index
    %31 = vector.load %arg6[%c0_16, %c0_17] : memref<4x8xf32, #tpu.memory_space<vmem>>, vector<4x8xf32>
    tpu.vector_store %arg6[%c0_16, %c0_17], %30 {strides = array<i32>} : memref<4x8xf32, #tpu.memory_space<vmem>>, vector<4x8xf32>,
    return
  }
  func.func @transform_0(%arg0: i32) -> (i32, i32, i32) {
    %c0_i32 = arith.constant 0 : i32
    %c0_i32_0 = arith.constant 0 : i32
    %c0_i32_1 = arith.constant 0 : i32
    return %arg0, %c0_i32, %c0_i32_0 : i32, i32, i32
  }
  func.func @transform_1(%arg0: i32) -> (i32, i32) {
    %c0_i32 = arith.constant 0 : i32
    %c0_i32_0 = arith.constant 0 : i32
    %c0_i32_1 = arith.constant 0 : i32
    return %c0_i32, %c0_i32_0 : i32, i32
  }
  func.func @transform_2(%arg0: i32) -> (i32, i32) {
    %c0_i32 = arith.constant 0 : i32
    %c0_i32_0 = arith.constant 0 : i32
    %c0_i32_1 = arith.constant 0 : i32
    return %c0_i32, %c0_i32_0 : i32, i32
  }
  func.func @transform_3(%arg0: i32) -> (i32, i32) {
    %c0_i32 = arith.constant 0 : i32
    %c0_i32_0 = arith.constant 0 : i32
    %c0_i32_1 = arith.constant 0 : i32
    return %c0_i32, %c0_i32_0 : i32, i32
  }
  func.func @transform_4(%arg0: i32) -> (i32, i32) {
    %c0_i32 = arith.constant 0 : i32
    %c0_i32_0 = arith.constant 0 : i32
    return %arg0, %c0_i32 : i32, i32
  }
  func.func @transform_5(%arg0: i32) -> (i32, i32) {
    %c0_i32 = arith.constant 0 : i32
    %c0_i32_0 = arith.constant 0 : i32
    return %arg0, %c0_i32 : i32, i32
  }
}

module attributes {stable_mosaic.version = 11 : i64} {
  func.func @kernel(%arg0: i32, %arg1: memref<4x8x128xf32, #tpu.memory_space<vmem>>, %arg2: memref<128x128xf32, #tpu.memory_space<vmem>>, %arg3: memref<1x128xf32, #tpu.memory_space<vmem>>, %arg4: memref<1x128xf32, #tpu.memory_space<vmem>>, %arg5: memref<4x8xf32, #tpu.memory_space<vmem>>, %arg6: memref<4x8xf32, #tpu.memory_space<vmem>>) attributes {dimension_semantics = [#tpu.dimension_semantics<parallel>], iteration_bounds = array<i64: 1>, scalar_prefetch = 0 : i64, scratch_operands = 0 : i64, tpu.core_type = #tpu.core_type<tc>, window_params = [{transform_indices = @transform_0, window_bounds = array<i64: 4, 8, 128>}, {pipeline_mode = #tpu.pipeline_mode<synchronous>, transform_indices = @transform_1, window_bounds = array<i64: 128, 128>}, {pipeline_mode = #tpu.pipeline_mode<synchronous>, transform_indices = @transform_2, window_bounds = array<i64: 1, 128>}, {pipeline_mode = #tpu.pipeline_mode<synchronous>, transform_indices = @transform_3, window_bounds = array<i64: 1, 128>}, {transform_indices = @transform_4, window_bounds = array<i64: 4, 8>}, {transform_indices = @transform_5, window_bounds = array<i64: 4, 8>}]} {
    %c0 = arith.constant 0 : index
    %c0_0 = arith.constant 0 : index
    %c0_1 = arith.constant 0 : index
    %0 = vector.load %arg1[%c0, %c0_0, %c0_1] : memref<4x8x128xf32, #tpu.memory_space<vmem>>, vector<4x8x128xf32>
    %1 = vector.shape_cast %0 : vector<4x8x128xf32> to vector<32x128xf32>
    %c0_2 = arith.constant 0 : index
    %c0_3 = arith.constant 0 : index
    %2 = vector.load %arg2[%c0_2, %c0_3] : memref<128x128xf32, #tpu.memory_space<vmem>>, vector<128x128xf32>
    %cst = arith.constant dense<0.000000e+00> : vector<32x128xf32>
    %3 = tpu.matmul %1, %2, %cst {dimension_numbers = #tpu.dot_dimension_numbers<[1], [1], [0], [0], [0, 0, 1, 0], [], []>} : vector<32x128xf32>, vector<128x128xf32>, vector<32x128xf32> -> vector<32x128xf32>
    %c0_4 = arith.constant 0 : index
    %c0_5 = arith.constant 0 : index
    %4 = vector.load %arg3[%c0_4, %c0_5] : memref<1x128xf32, #tpu.memory_space<vmem>>, vector<1x128xf32>
    %5 = vector.broadcast %4 : vector<1x128xf32> to vector<32x128xf32>
    %6 = arith.addf %3, %5 : vector<32x128xf32>
    %7 = math.tanh %6 : vector<32x128xf32>
    %8 = vector.shape_cast %7 : vector<32x128xf32> to vector<4x8x128xf32>
    %c0_6 = arith.constant 0 : index
    %c0_7 = arith.constant 0 : index
    %9 = vector.load %arg4[%c0_6, %c0_7] : memref<1x128xf32, #tpu.memory_space<vmem>>, vector<1x128xf32>
    %10 = vector.shape_cast %9 : vector<1x128xf32> to vector<1x1x128xf32>
    %11 = vector.broadcast %10 : vector<1x1x128xf32> to vector<4x8x128xf32>
    %12 = arith.mulf %8, %11 : vector<4x8x128xf32>
    %cst_8 = arith.constant dense<0.000000e+00> : vector<4x8xf32>
    %13 = vector.multi_reduction <add>, %12, %cst_8 [2] : vector<4x8x128xf32> to vector<4x8xf32>
    %c0_9 = arith.constant 0 : index
    %c0_10 = arith.constant 0 : index
    %14 = vector.load %arg5[%c0_9, %c0_10] : memref<4x8xf32, #tpu.memory_space<vmem>>, vector<4x8xf32>
    %cst_11 = arith.constant 0.000000e+00 : f32
    %15 = vector.broadcast %cst_11 : f32 to vector<4x8xf32>
    %16 = arith.cmpf oeq, %14, %15 : vector<4x8xf32>
    %cst_12 = arith.constant -1.000000e+04 : f32
    %cst_13 = arith.constant 0.000000e+00 : f32
    %17 = vector.broadcast %cst_12 : f32 to vector<4x8xf32>
    %18 = vector.broadcast %cst_13 : f32 to vector<4x8xf32>
    %19 = arith.select %16, %17, %18 : vector<4x8xi1>, vector<4x8xf32>
    %20 = arith.addf %13, %19 : vector<4x8xf32>
    %cst_14 = arith.constant dense<0xFF800000> : vector<4xf32>
    %21 = vector.multi_reduction <maximumf>, %20, %cst_14 [1] : vector<4x8xf32> to vector<4xf32>
    %22 = vector.shape_cast %21 : vector<4xf32> to vector<4x1xf32>
    %23 = vector.broadcast %22 : vector<4x1xf32> to vector<4x8xf32>
    %24 = arith.subf %20, %23 : vector<4x8xf32>
    %25 = math.exp %24 : vector<4x8xf32>
    %cst_15 = arith.constant dense<0.000000e+00> : vector<4xf32>
    %26 = vector.multi_reduction <add>, %25, %cst_15 [1] : vector<4x8xf32> to vector<4xf32>
    %27 = vector.shape_cast %26 : vector<4xf32> to vector<4x1xf32>
    %28 = tpu.reciprocal %27 : vector<4x1xf32> -> vector<4x1xf32>
    %29 = vector.broadcast %28 : vector<4x1xf32> to vector<4x8xf32>
    %30 = arith.mulf %25, %29 : vector<4x8xf32>
    %c0_16 = arith.constant 0 : index
    %c0_17 = arith.constant 0 : index
    %31 = vector.load %arg6[%c0_16, %c0_17] : memref<4x8xf32, #tpu.memory_space<vmem>>, vector<4x8xf32>
    tpu.vector_store %arg6[%c0_16, %c0_17], %30 {strides = array<i32>} : memref<4x8xf32, #tpu.memory_space<vmem>>, vector<4x8xf32>,
    return
  }
  func.func @transform_0(%arg0: i32) -> (i32, i32, i32) {
    %c0_i32 = arith.constant 0 : i32
    %c0_i32_0 = arith.constant 0 : i32
    %c0_i32_1 = arith.constant 0 : i32
    return %arg0, %c0_i32, %c0_i32_0 : i32, i32, i32
  }
  func.func @transform_1(%arg0: i32) -> (i32, i32) {
    %c0_i32 = arith.constant 0 : i32
    %c0_i32_0 = arith.constant 0 : i32
    %c0_i32_1 = arith.constant 0 : i32
    return %c0_i32, %c0_i32_0 : i32, i32
  }
  func.func @transform_2(%arg0: i32) -> (i32, i32) {
    %c0_i32 = arith.constant 0 : i32
    %c0_i32_0 = arith.constant 0 : i32
    %c0_i32_1 = arith.constant 0 : i32
    return %c0_i32, %c0_i32_0 : i32, i32
  }
  func.func @transform_3(%arg0: i32) -> (i32, i32) {
    %c0_i32 = arith.constant 0 : i32
    %c0_i32_0 = arith.constant 0 : i32
    %c0_i32_1 = arith.constant 0 : i32
    return %c0_i32, %c0_i32_0 : i32, i32
  }
  func.func @transform_4(%arg0: i32) -> (i32, i32) {
    %c0_i32 = arith.constant 0 : i32
    %c0_i32_0 = arith.constant 0 : i32
    return %arg0, %c0_i32 : i32, i32
  }
  func.func @transform_5(%arg0: i32) -> (i32, i32) {
    %c0_i32 = arith.constant 0 : i32
    %c0_i32_0 = arith.constant 0 : i32
    return %arg0, %c0_i32 : i32, i32
  }
}

</mosaic_0001>

<llo_original>
// kernel: tpu_custom_call.1
$region0: #{tpu_custom_call.1}
  #allocation0 [shape = 'u32[]', space=smem, size = 0x4, offset = 0x4, fixed_abs, tag = 'smem constant byte address 0x4 - core index']
  #allocation1 [shape = 'u32[72,128]{1,0:T(1,128)}', space=vmem, size = 0x9000, scoped, tag = 'internal scratch']
  %s0 = inlined_call_operand.hbm [shape: f32[4,8,128], index: 0, kind: input, shape index: {}]
  %s1 = inlined_call_operand.hbm [shape: f32[128,128], index: 1, kind: input, shape index: {}]
  %s2 = inlined_call_operand.vmem [shape: f32[1,128], index: 2, kind: input, shape index: {}]
  %s3 = inlined_call_operand.vmem [shape: f32[1,128], index: 3, kind: input, shape index: {}]
  %s4 = inlined_call_operand.hbm [shape: f32[4,8], index: 4, kind: input, shape index: {}]
  %s5 = inlined_call_operand.hbm [shape: f32[4,8], index: 5, kind: output, shape index: {}]
  %s6 = sld [smem:[#allocation0]]
  $region42: #{tpu_custom_call.1} parent=0
    _
  %s8 = ssub.s32 1, %s6
  %s9 = scalar_select 0, %s8, %s6
  $region1: #{tpu_custom_call.1} parent=0
    #allocation2 [shape = 'u8[16384]{0}', space=vmem, size = 0x4000, scoped, tag = 'input window, operand 0, single buffered']
    #allocation3 [shape = 's32[1]{0}', space=sflag, size = 0x4, scoped, tag = 'scoped memory for tpu_custom_call.1']
    #allocation4 [shape = 's32[1]{0}', space=sflag, size = 0x4, scoped, tag = 'scoped memory for tpu_custom_call.1']
    #allocation5 [shape = 'u8[65536]{0}', space=vmem, size = 0x10000, scoped, tag = 'input window, operand 1, single buffered']
    #allocation6 [shape = 's32[1]{0}', space=sflag, size = 0x4, scoped, tag = 'scoped memory for tpu_custom_call.1']
    #allocation7 [shape = 'u8[2048]{0}', space=vmem, size = 0x800, scoped, tag = 'input window, operand 4, single buffered']
    #allocation8 [shape = 'u8[2048]{0}', space=vmem, size = 0x800, scoped, tag = 'output window, operand 0, single buffered']
    %10 = vsyncpa [#allocation3], 0
    %11 = vsyncpa [#allocation6], 0
    %12 = vsyncpa [#allocation4], 0
    // Predicated region
    $region2: #{tpu_custom_call.1} parent=1 // pred_check
      _
    $region3: #{tpu_custom_call.1} parent=1 // pred_check_branch
      %14 = sbr.rel (0) target = $region5
    $region4: #{tpu_custom_call.1} parent=1 // pred_region
      %16 = vsyncadd [#allocation3], 0
      %s17 = sshll.u32 %s0, 4
      %s18 = int_to_ptr.hbm [resolvable:$true] %s17
      %s19 = sshll.u32 [#allocation2], 4
      %s20 = int_to_ptr.vmem [resolvable:$true] %s19
      %25 = dma.hbm_to_vmem [thread:$0]  %s18, 512, %s20, [#allocation3], 128, 128, 8
    $region5: #{tpu_custom_call.1} parent=1 // pred_fallthru
      _
    // Predicated region
    $region6: #{tpu_custom_call.1} parent=1 // pred_check
      _
    $region7: #{tpu_custom_call.1} parent=1 // pred_check_branch
      %27 = sbr.rel (0) target = $region9
    $region8: #{tpu_custom_call.1} parent=1 // pred_region
      %29 = vsyncadd [#allocation6], 0
      %s30 = sshll.u32 %s1, 4
      %s31 = int_to_ptr.hbm [resolvable:$true] %s30
      %s32 = sshll.u32 [#allocation5], 4
      %s33 = int_to_ptr.vmem [resolvable:$true] %s32
      %38 = dma.hbm_to_vmem [thread:$0]  %s31, 2048, %s33, [#allocation6], 128, 128, 8
    $region9: #{tpu_custom_call.1} parent=1 // pred_fallthru
      _
    // Predicated region
    $region10: #{tpu_custom_call.1} parent=1 // pred_check
      _
    $region11: #{tpu_custom_call.1} parent=1 // pred_check_branch
      %40 = sbr.rel (0) target = $region13
    $region12: #{tpu_custom_call.1} parent=1 // pred_region
      _
    $region13: #{tpu_custom_call.1} parent=1 // pred_fallthru
      _
    // Predicated region
    $region14: #{tpu_custom_call.1} parent=1 // pred_check
      _
    $region15: #{tpu_custom_call.1} parent=1 // pred_check_branch
      %42 = sbr.rel (0) target = $region17
    $region16: #{tpu_custom_call.1} parent=1 // pred_region
      _
    $region17: #{tpu_custom_call.1} parent=1 // pred_fallthru
      _
    // Predicated region
    $region18: #{tpu_custom_call.1} parent=1 // pred_check
      _
    $region19: #{tpu_custom_call.1} parent=1 // pred_check_branch
      %44 = sbr.rel (0) target = $region21
    $region20: #{tpu_custom_call.1} parent=1 // pred_region
      %46 = vsyncadd [#allocation6], 0
      %s48 = sshll.u32 %s4, 4
      %s49 = int_to_ptr.hbm [resolvable:$true] %s48
      %s50 = sshll.u32 [#allocation7], 4
      %s51 = int_to_ptr.vmem [resolvable:$true] %s50
      %53 = dma.hbm_to_vmem [thread:$0]  %s49, 64, %s51, [#allocation6]
    $region21: #{tpu_custom_call.1} parent=1 // pred_fallthru
      _
    // Predicated region
    $region22: #{tpu_custom_call.1} parent=1 // pred_check
      _
    $region23: #{tpu_custom_call.1} parent=1 // pred_check_branch
      %55 = sbr.rel (0) target = $region25
    $region24: #{tpu_custom_call.1} parent=1 // pred_region
      %57 = dma.done [#allocation3], 512
    $region25: #{tpu_custom_call.1} parent=1 // pred_fallthru
      _
    // Predicated region
    $region26: #{tpu_custom_call.1} parent=1 // pred_check
      _
    $region27: #{tpu_custom_call.1} parent=1 // pred_check_branch
      %59 = sbr.rel (0) target = $region29
    $region28: #{tpu_custom_call.1} parent=1 // pred_region
      %61 = dma.done [#allocation6], 2048
    $region29: #{tpu_custom_call.1} parent=1 // pred_fallthru
      _
    // Predicated region
    $region30: #{tpu_custom_call.1} parent=1 // pred_check
      _
    $region31: #{tpu_custom_call.1} parent=1 // pred_check_branch
      %63 = sbr.rel (0) target = $region33
    $region32: #{tpu_custom_call.1} parent=1 // pred_region
      %65 = dma.done [#allocation6], 64
    $region33: #{tpu_custom_call.1} parent=1 // pred_fallthru
      _
    %v66 = vld [vmem:[#allocation2] sm:$0xff]
    %v67 = vld [vmem:[#allocation2 + $0x8] sm:$0xff]
    %v68 = vld [vmem:[#allocation2 + $0x10] sm:$0xff]
    %v69 = vld [vmem:[#allocation2 + $0x18] sm:$0xff]
    %v70 = vld [vmem:[#allocation5] sm:$0xff]
    %v71 = vld [vmem:[#allocation5 + $0x8] sm:$0xff]
    %v72 = vld [vmem:[#allocation5 + $0x10] sm:$0xff]
    %v73 = vld [vmem:[#allocation5 + $0x18] sm:$0xff]
    %v74 = vld [vmem:[#allocation5 + $0x20] sm:$0xff]
    %v75 = vld [vmem:[#allocation5 + $0x28] sm:$0xff]
    %v76 = vld [vmem:[#allocation5 + $0x30] sm:$0xff]
    %v77 = vld [vmem:[#allocation5 + $0x38] sm:$0xff]
    %v78 = vld [vmem:[#allocation5 + $0x40] sm:$0xff]
    %v79 = vld [vmem:[#allocation5 + $0x48] sm:$0xff]
    %v80 = vld [vmem:[#allocation5 + $0x50] sm:$0xff]
    %v81 = vld [vmem:[#allocation5 + $0x58] sm:$0xff]
    %v82 = vld [vmem:[#allocation5 + $0x60] sm:$0xff]
    %v83 = vld [vmem:[#allocation5 + $0x68] sm:$0xff]
    %v84 = vld [vmem:[#allocation5 + $0x70] sm:$0xff]
    %v85 = vld [vmem:[#allocation5 + $0x78] sm:$0xff]
    %v86 = vld [vmem:[%s2] sm:$0x1]
    %v88 = vperm.slane %v86, 0
    %90 = vmatpush.xpose.msra.mxu0 %v85
    %91 = vmatpush.xpose.msra.mxu0 %v84
    %92 = vmatpush.xpose.msra.mxu0 %v83
    %93 = vmatpush.xpose.msra.mxu0 %v82
    %94 = vmatpush.xpose.msra.mxu0 %v81
    %95 = vmatpush.xpose.msra.mxu0 %v80
    %96 = vmatpush.xpose.msra.mxu0 %v79
    %97 = vmatpush.xpose.msra.mxu0 %v78
    %98 = vmatpush.xpose.msra.mxu0 %v77
    %99 = vmatpush.xpose.msra.mxu0 %v76
    %100 = vmatpush.xpose.msra.mxu0 %v75
    %101 = vmatpush.xpose.msra.mxu0 %v74
    %102 = vmatpush.xpose.msra.mxu0 %v73
    %103 = vmatpush.xpose.msra.mxu0 %v72
    %104 = vmatpush.xpose.msra.mxu0 %v71
    %105 = vmatpush.xpose.msra.mxu0 %v70
    %106 = vmatmul.f32.gmra.mxu0 %v66
    %v107 = vpop.f32.mrf.mxu0
    %v108 = vadd.f32 %v88, %v107
    %109 = vmatmul.f32.gmra.mxu0 %v67
    %v110 = vpop.f32.mrf.mxu0
    %v111 = vadd.f32 %v88, %v110
    %112 = vmatmul.f32.gmra.mxu0 %v68
    %v113 = vpop.f32.mrf.mxu0
    %v114 = vadd.f32 %v88, %v113
    %115 = vmatmul.f32.gmra.mxu0 %v69
    %v116 = vpop.f32.mrf.mxu0
    %v117 = vadd.f32 %v88, %v116
    %118 = vdwg.mxu0
    %v119 = vtanh.pop %v108
    %v120 = vtanh.pop %v111
    %v121 = vtanh.pop %v114
    %v122 = vtanh.pop %v117
    %v123 = vld [vmem:[%s3] sm:$0x1]
    %v125 = vperm.slane %v123, 0
    %v127 = vmul.f32 %v119, %v125
    %v128 = vmul.f32 %v120, %v125
    %v129 = vmul.f32 %v121, %v125
    %v130 = vmul.f32 %v122, %v125
    %131 = vadd.xlane.f32.xlu0 %v127
    %v132 = vpop.xlane.xlu0 %131
    %133 = vadd.xlane.f32.xlu0 %v128
    %v134 = vpop.xlane.xlu0 %133
    %135 = vadd.xlane.f32.xlu0 %v129
    %v136 = vpop.xlane.xlu0 %135
    %137 = vadd.xlane.f32.xlu0 %v130
    %v138 = vpop.xlane.xlu0 %137
    %v139 = vld [vmem:[#allocation7] sm:$0xf]
    %vm140 = vcmp.eq.f32.partialorder %v139, 0.0
    %v141 = vsel %vm140, -10000.0, 0.0
    %v143 = vperm.slane %v141, 0
    %v144 = vlaneseq
    %v145 = vshrl.u32 %v144, 7
    %147 = vset.pattern.permute.xlu0 %v145
    %148 = vperm.xlu0 %147, %v143
    %v149 = vpop.permute.xlu0 %148
    %v150 = vperm.slane %v141, 1
    %v151 = vlaneseq
    %v152 = vshrl.u32 %v151, 7
    %154 = vset.pattern.permute.xlu0 %v152
    %155 = vperm.xlu0 %154, %v150
    %v156 = vpop.permute.xlu0 %155
    %v157 = vperm.slane %v141, 2
    %v158 = vlaneseq
    %v159 = vshrl.u32 %v158, 7
    %161 = vset.pattern.permute.xlu0 %v159
    %162 = vperm.xlu0 %161, %v157
    %v163 = vpop.permute.xlu0 %162
    %v164 = vperm.slane %v141, 3
    %v165 = vlaneseq
    %v166 = vshrl.u32 %v165, 7
    %168 = vset.pattern.permute.xlu0 %v166
    %169 = vperm.xlu0 %168, %v164
    %v170 = vpop.permute.xlu0 %169
    %v175 = vadd.f32 %v132, %v149
    %v176 = vadd.f32 %v134, %v156
    %v177 = vadd.f32 %v136, %v163
    %v178 = vadd.f32 %v138, %v170
    %183 = vset.pattern.permute.xlu0 0
    %184 = vperm.xlu0 %183, %v175
    %v185 = vpop.permute.xlu0 %184
    %186 = vset.pattern.permute.xlu0 0
    %187 = vperm.xlu0 %186, %v176
    %v188 = vpop.permute.xlu0 %187
    %189 = vset.pattern.permute.xlu0 0
    %190 = vperm.xlu0 %189, %v177
    %v191 = vpop.permute.xlu0 %190
    %192 = vset.pattern.permute.xlu0 0
    %193 = vperm.xlu0 %192, %v178
    %v194 = vpop.permute.xlu0 %193
    %v195 = vlaneseq
    %v196 = vand.u32 %v195, 127
    %v197 = vperm.slane %v185, %v196
    %v198 = vperm.slane %v188, %v196
    %v199 = vperm.slane %v191, %v196
    %v200 = vperm.slane %v194, %v196
    %vm201 = vcmask 1041409
    %v202 = vsel %vm201, %v198, %v197
    %vm203 = vcmask 1042434
    %v204 = vsel %vm203, %v199, %v202
    %vm205 = vcmask 1043459
    %v206 = vsel %vm205, %v200, %v204
    %vm208 = vcmask 60416
    %v209 = vsel %vm208, %v206, -inf
    %210 = vmax.xlane.f32.xlu0 %v209
    %v211 = vpop.xlane.xlu0 %210
    %v213 = vperm.slane %v211, 0
    %v214 = vperm.slane %v211, 1
    %v215 = vperm.slane %v211, 2
    %v216 = vperm.slane %v211, 3
    %v221 = vsub.f32 %v175, %v213
    %v222 = vsub.f32 %v176, %v214
    %v223 = vsub.f32 %v177, %v215
    %v224 = vsub.f32 %v178, %v216
    %v225 = vmul.f32 %v221, 1.442695
    %v226 = vpow.pop %v225
    %v227 = vmul.f32 %v222, 1.442695
    %v228 = vpow.pop %v227
    %v229 = vmul.f32 %v223, 1.442695
    %v230 = vpow.pop %v229
    %v231 = vmul.f32 %v224, 1.442695
    %v232 = vpow.pop %v231
    %237 = vset.pattern.permute.xlu0 0
    %238 = vperm.xlu0 %237, %v226
    %v239 = vpop.permute.xlu0 %238
    %240 = vset.pattern.permute.xlu0 0
    %241 = vperm.xlu0 %240, %v228
    %v242 = vpop.permute.xlu0 %241
    %243 = vset.pattern.permute.xlu0 0
    %244 = vperm.xlu0 %243, %v230
    %v245 = vpop.permute.xlu0 %244
    %246 = vset.pattern.permute.xlu0 0
    %247 = vperm.xlu0 %246, %v232
    %v248 = vpop.permute.xlu0 %247
    %v249 = vperm.slane %v239, %v196
    %v250 = vperm.slane %v242, %v196
    %v251 = vperm.slane %v245, %v196
    %v252 = vperm.slane %v248, %v196
    %v253 = vsel %vm201, %v250, %v249
    %v254 = vsel %vm203, %v251, %v253
    %v255 = vsel %vm205, %v252, %v254
    %v257 = vsel %vm208, %v255, 0.0
    %258 = vadd.xlane.f32.xlu0 %v257
    %v259 = vpop.xlane.xlu0 %258
    %v260 = vrcp.pop %v259
    %v261 = vmul.f32 %v259, %v260
    %v262 = vsub.f32 1.0, %v261
    %v263 = vmul.f32 %v260, %v262
    %v264 = vadd.f32 %v260, %v263
    %vm265 = vweird.f32 %v259
    %vm266 = vweird.f32 %v260
    %vm267 = vmor %vm265, %vm266
    %v268 = vsel %vm267, %v260, %v264
    %v269 = vand.u32 2147483647, %v259
    %vm270 = vcmp.eq.f32.partialorder %v269, 8.507059e+37
    %v271 = vand.u32 %v259, 2147483648
    %v272 = vor.u32 1.1754944e-38, %v271
    %v273 = vsel %vm270, %v272, %v268
    %v275 = vperm.slane %v273, 0
    %v276 = vperm.slane %v273, 1
    %v277 = vperm.slane %v273, 2
    %v278 = vperm.slane %v273, 3
    %v283 = vmul.f32 %v226, %v275
    %v284 = vmul.f32 %v228, %v276
    %v285 = vmul.f32 %v230, %v277
    %v286 = vmul.f32 %v232, %v278
    %291 = vset.pattern.permute.xlu0 0
    %292 = vperm.xlu0 %291, %v283
    %v293 = vpop.permute.xlu0 %292
    %294 = vset.pattern.permute.xlu0 0
    %295 = vperm.xlu0 %294, %v284
    %v296 = vpop.permute.xlu0 %295
    %297 = vset.pattern.permute.xlu0 0
    %298 = vperm.xlu0 %297, %v285
    %v299 = vpop.permute.xlu0 %298
    %300 = vset.pattern.permute.xlu0 0
    %301 = vperm.xlu0 %300, %v286
    %v302 = vpop.permute.xlu0 %301
    %v303 = vperm.slane %v293, %v196
    %v304 = vperm.slane %v296, %v196
    %v305 = vperm.slane %v299, %v196
    %v306 = vperm.slane %v302, %v196
    %v307 = vsel %vm201, %v304, %v303
    %v308 = vsel %vm203, %v305, %v307
    %v309 = vsel %vm205, %v306, %v308
    %311 = vst.msk [vmem:[#allocation8] sm:$0xf] %vm208, %v309
    // Predicated region
    $region34: #{tpu_custom_call.1} parent=1 // pred_check
      _
    $region35: #{tpu_custom_call.1} parent=1 // pred_check_branch
      %313 = sbr.rel (0) target = $region37
    $region36: #{tpu_custom_call.1} parent=1 // pred_region
      %315 = vsyncadd [#allocation4], 0
      %s317 = sshll.u32 [#allocation8], 4
      %s318 = int_to_ptr.vmem [resolvable:$true] %s317
      %s319 = sshll.u32 %s5, 4
      %s320 = int_to_ptr.hbm [resolvable:$true] %s319
      %322 = dma.vmem_to_hbm [thread:$0]  %s318, 64, %s320, [#allocation4]
    $region37: #{tpu_custom_call.1} parent=1 // pred_fallthru
      _
    // Predicated region
    $region38: #{tpu_custom_call.1} parent=1 // pred_check
      _
    $region39: #{tpu_custom_call.1} parent=1 // pred_check_branch
      %324 = sbr.rel (0) target = $region41
    $region40: #{tpu_custom_call.1} parent=1 // pred_region
      %326 = dma.done [#allocation4], 64
    $region41: #{tpu_custom_call.1} parent=1 // pred_fallthru
      _
    %327 = vsyncpa [#allocation3], 1
    %328 = vsyncpa [#allocation6], 1
    %329 = vsyncpa [#allocation4], 1

// kernel: tpu_custom_call.1
$region0: #{tpu_custom_call.1}
  #allocation0 [shape = 'u32[]', space=smem, size = 0x4, offset = 0x4, fixed_abs, tag = 'smem constant byte address 0x4 - core index']
  #allocation1 [shape = 'u32[72,128]{1,0:T(1,128)}', space=vmem, size = 0x9000, scoped, tag = 'internal scratch']
  %s0 = inlined_call_operand.hbm [shape: f32[4,8,128], index: 0, kind: input, shape index: {}]
  %s1 = inlined_call_operand.hbm [shape: f32[128,128], index: 1, kind: input, shape index: {}]
  %s2 = inlined_call_operand.vmem [shape: f32[1,128], index: 2, kind: input, shape index: {}]
  %s3 = inlined_call_operand.vmem [shape: f32[1,128], index: 3, kind: input, shape index: {}]
  %s4 = inlined_call_operand.hbm [shape: f32[4,8], index: 4, kind: input, shape index: {}]
  %s5 = inlined_call_operand.hbm [shape: f32[4,8], index: 5, kind: output, shape index: {}]
  %s6 = sld [smem:[#allocation0]]
  $region42: #{tpu_custom_call.1} parent=0
    _
  %s8 = ssub.s32 1, %s6
  %s9 = scalar_select 0, %s8, %s6
  $region1: #{tpu_custom_call.1} parent=0
    #allocation2 [shape = 'u8[16384]{0}', space=vmem, size = 0x4000, scoped, tag = 'input window, operand 0, single buffered']
    #allocation3 [shape = 's32[1]{0}', space=sflag, size = 0x4, scoped, tag = 'scoped memory for tpu_custom_call.1']
    #allocation4 [shape = 's32[1]{0}', space=sflag, size = 0x4, scoped, tag = 'scoped memory for tpu_custom_call.1']
    #allocation5 [shape = 'u8[65536]{0}', space=vmem, size = 0x10000, scoped, tag = 'input window, operand 1, single buffered']
    #allocation6 [shape = 's32[1]{0}', space=sflag, size = 0x4, scoped, tag = 'scoped memory for tpu_custom_call.1']
    #allocation7 [shape = 'u8[2048]{0}', space=vmem, size = 0x800, scoped, tag = 'input window, operand 4, single buffered']
    #allocation8 [shape = 'u8[2048]{0}', space=vmem, size = 0x800, scoped, tag = 'output window, operand 0, single buffered']
    %10 = vsyncpa [#allocation3], 0
    %11 = vsyncpa [#allocation6], 0
    %12 = vsyncpa [#allocation4], 0
    // Predicated region
    $region2: #{tpu_custom_call.1} parent=1 // pred_check
      _
    $region3: #{tpu_custom_call.1} parent=1 // pred_check_branch
      %14 = sbr.rel (0) target = $region5
    $region4: #{tpu_custom_call.1} parent=1 // pred_region
      %16 = vsyncadd [#allocation3], 0
      %s17 = sshll.u32 %s0, 4
      %s18 = int_to_ptr.hbm [resolvable:$true] %s17
      %s19 = sshll.u32 [#allocation2], 4
      %s20 = int_to_ptr.vmem [resolvable:$true] %s19
      %25 = dma.hbm_to_vmem [thread:$0]  %s18, 512, %s20, [#allocation3], 128, 128, 8
    $region5: #{tpu_custom_call.1} parent=1 // pred_fallthru
      _
    // Predicated region
    $region6: #{tpu_custom_call.1} parent=1 // pred_check
      _
    $region7: #{tpu_custom_call.1} parent=1 // pred_check_branch
      %27 = sbr.rel (0) target = $region9
    $region8: #{tpu_custom_call.1} parent=1 // pred_region
      %29 = vsyncadd [#allocation6], 0
      %s30 = sshll.u32 %s1, 4
      %s31 = int_to_ptr.hbm [resolvable:$true] %s30
      %s32 = sshll.u32 [#allocation5], 4
      %s33 = int_to_ptr.vmem [resolvable:$true] %s32
      %38 = dma.hbm_to_vmem [thread:$0]  %s31, 2048, %s33, [#allocation6], 128, 128, 8
    $region9: #{tpu_custom_call.1} parent=1 // pred_fallthru
      _
    // Predicated region
    $region10: #{tpu_custom_call.1} parent=1 // pred_check
      _
    $region11: #{tpu_custom_call.1} parent=1 // pred_check_branch
      %40 = sbr.rel (0) target = $region13
    $region12: #{tpu_custom_call.1} parent=1 // pred_region
      _
    $region13: #{tpu_custom_call.1} parent=1 // pred_fallthru
      _
    // Predicated region
    $region14: #{tpu_custom_call.1} parent=1 // pred_check
      _
    $region15: #{tpu_custom_call.1} parent=1 // pred_check_branch
      %42 = sbr.rel (0) target = $region17
    $region16: #{tpu_custom_call.1} parent=1 // pred_region
      _
    $region17: #{tpu_custom_call.1} parent=1 // pred_fallthru
      _
    // Predicated region
    $region18: #{tpu_custom_call.1} parent=1 // pred_check
      _
    $region19: #{tpu_custom_call.1} parent=1 // pred_check_branch
      %44 = sbr.rel (0) target = $region21
    $region20: #{tpu_custom_call.1} parent=1 // pred_region
      %46 = vsyncadd [#allocation6], 0
      %s48 = sshll.u32 %s4, 4
      %s49 = int_to_ptr.hbm [resolvable:$true] %s48
      %s50 = sshll.u32 [#allocation7], 4
      %s51 = int_to_ptr.vmem [resolvable:$true] %s50
      %53 = dma.hbm_to_vmem [thread:$0]  %s49, 64, %s51, [#allocation6]
    $region21: #{tpu_custom_call.1} parent=1 // pred_fallthru
      _
    // Predicated region
    $region22: #{tpu_custom_call.1} parent=1 // pred_check
      _
    $region23: #{tpu_custom_call.1} parent=1 // pred_check_branch
      %55 = sbr.rel (0) target = $region25
    $region24: #{tpu_custom_call.1} parent=1 // pred_region
      %57 = dma.done [#allocation3], 512
    $region25: #{tpu_custom_call.1} parent=1 // pred_fallthru
      _
    // Predicated region
    $region26: #{tpu_custom_call.1} parent=1 // pred_check
      _
    $region27: #{tpu_custom_call.1} parent=1 // pred_check_branch
      %59 = sbr.rel (0) target = $region29
    $region28: #{tpu_custom_call.1} parent=1 // pred_region
      %61 = dma.done [#allocation6], 2048
    $region29: #{tpu_custom_call.1} parent=1 // pred_fallthru
      _
    // Predicated region
    $region30: #{tpu_custom_call.1} parent=1 // pred_check
      _
    $region31: #{tpu_custom_call.1} parent=1 // pred_check_branch
      %63 = sbr.rel (0) target = $region33
    $region32: #{tpu_custom_call.1} parent=1 // pred_region
      %65 = dma.done [#allocation6], 64
    $region33: #{tpu_custom_call.1} parent=1 // pred_fallthru
      _
    %v66 = vld [vmem:[#allocation2] sm:$0xff]
    %v67 = vld [vmem:[#allocation2 + $0x8] sm:$0xff]
    %v68 = vld [vmem:[#allocation2 + $0x10] sm:$0xff]
    %v69 = vld [vmem:[#allocation2 + $0x18] sm:$0xff]
    %v70 = vld [vmem:[#allocation5] sm:$0xff]
    %v71 = vld [vmem:[#allocation5 + $0x8] sm:$0xff]
    %v72 = vld [vmem:[#allocation5 + $0x10] sm:$0xff]
    %v73 = vld [vmem:[#allocation5 + $0x18] sm:$0xff]
    %v74 = vld [vmem:[#allocation5 + $0x20] sm:$0xff]
    %v75 = vld [vmem:[#allocation5 + $0x28] sm:$0xff]
    %v76 = vld [vmem:[#allocation5 + $0x30] sm:$0xff]
    %v77 = vld [vmem:[#allocation5 + $0x38] sm:$0xff]
    %v78 = vld [vmem:[#allocation5 + $0x40] sm:$0xff]
    %v79 = vld [vmem:[#allocation5 + $0x48] sm:$0xff]
    %v80 = vld [vmem:[#allocation5 + $0x50] sm:$0xff]
    %v81 = vld [vmem:[#allocation5 + $0x58] sm:$0xff]
    %v82 = vld [vmem:[#allocation5 + $0x60] sm:$0xff]
    %v83 = vld [vmem:[#allocation5 + $0x68] sm:$0xff]
    %v84 = vld [vmem:[#allocation5 + $0x70] sm:$0xff]
    %v85 = vld [vmem:[#allocation5 + $0x78] sm:$0xff]
    %v86 = vld [vmem:[%s2] sm:$0x1]
    %v88 = vperm.slane %v86, 0
    %90 = vmatpush.xpose.msra.mxu0 %v85
    %91 = vmatpush.xpose.msra.mxu0 %v84
    %92 = vmatpush.xpose.msra.mxu0 %v83
    %93 = vmatpush.xpose.msra.mxu0 %v82
    %94 = vmatpush.xpose.msra.mxu0 %v81
    %95 = vmatpush.xpose.msra.mxu0 %v80
    %96 = vmatpush.xpose.msra.mxu0 %v79
    %97 = vmatpush.xpose.msra.mxu0 %v78
    %98 = vmatpush.xpose.msra.mxu0 %v77
    %99 = vmatpush.xpose.msra.mxu0 %v76
    %100 = vmatpush.xpose.msra.mxu0 %v75
    %101 = vmatpush.xpose.msra.mxu0 %v74
    %102 = vmatpush.xpose.msra.mxu0 %v73
    %103 = vmatpush.xpose.msra.mxu0 %v72
    %104 = vmatpush.xpose.msra.mxu0 %v71
    %105 = vmatpush.xpose.msra.mxu0 %v70
    %106 = vmatmul.f32.gmra.mxu0 %v66
    %v107 = vpop.f32.mrf.mxu0
    %v108 = vadd.f32 %v88, %v107
    %109 = vmatmul.f32.gmra.mxu0 %v67
    %v110 = vpop.f32.mrf.mxu0
    %v111 = vadd.f32 %v88, %v110
    %112 = vmatmul.f32.gmra.mxu0 %v68
    %v113 = vpop.f32.mrf.mxu0
    %v114 = vadd.f32 %v88, %v113
    %115 = vmatmul.f32.gmra.mxu0 %v69
    %v116 = vpop.f32.mrf.mxu0
    %v117 = vadd.f32 %v88, %v116
    %118 = vdwg.mxu0
    %v119 = vtanh.pop %v108
    %v120 = vtanh.pop %v111
    %v121 = vtanh.pop %v114
    %v122 = vtanh.pop %v117
    %v123 = vld [vmem:[%s3] sm:$0x1]
    %v125 = vperm.slane %v123, 0
    %v127 = vmul.f32 %v119, %v125
    %v128 = vmul.f32 %v120, %v125
    %v129 = vmul.f32 %v121, %v125
    %v130 = vmul.f32 %v122, %v125
    %131 = vadd.xlane.f32.xlu0 %v127
    %v132 = vpop.xlane.xlu0 %131
    %133 = vadd.xlane.f32.xlu0 %v128
    %v134 = vpop.xlane.xlu0 %133
    %135 = vadd.xlane.f32.xlu0 %v129
    %v136 = vpop.xlane.xlu0 %135
    %137 = vadd.xlane.f32.xlu0 %v130
    %v138 = vpop.xlane.xlu0 %137
    %v139 = vld [vmem:[#allocation7] sm:$0xf]
    %vm140 = vcmp.eq.f32.partialorder %v139, 0.0
    %v141 = vsel %vm140, -10000.0, 0.0
    %v143 = vperm.slane %v141, 0
    %v144 = vlaneseq
    %v145 = vshrl.u32 %v144, 7
    %147 = vset.pattern.permute.xlu0 %v145
    %148 = vperm.xlu0 %147, %v143
    %v149 = vpop.permute.xlu0 %148
    %v150 = vperm.slane %v141, 1
    %v151 = vlaneseq
    %v152 = vshrl.u32 %v151, 7
    %154 = vset.pattern.permute.xlu0 %v152
    %155 = vperm.xlu0 %154, %v150
    %v156 = vpop.permute.xlu0 %155
    %v157 = vperm.slane %v141, 2
    %v158 = vlaneseq
    %v159 = vshrl.u32 %v158, 7
    %161 = vset.pattern.permute.xlu0 %v159
    %162 = vperm.xlu0 %161, %v157
    %v163 = vpop.permute.xlu0 %162
    %v164 = vperm.slane %v141, 3
    %v165 = vlaneseq
    %v166 = vshrl.u32 %v165, 7
    %168 = vset.pattern.permute.xlu0 %v166
    %169 = vperm.xlu0 %168, %v164
    %v170 = vpop.permute.xlu0 %169
    %v175 = vadd.f32 %v132, %v149
    %v176 = vadd.f32 %v134, %v156
    %v177 = vadd.f32 %v136, %v163
    %v178 = vadd.f32 %v138, %v170
    %183 = vset.pattern.permute.xlu0 0
    %184 = vperm.xlu0 %183, %v175
    %v185 = vpop.permute.xlu0 %184
    %186 = vset.pattern.permute.xlu0 0
    %187 = vperm.xlu0 %186, %v176
    %v188 = vpop.permute.xlu0 %187
    %189 = vset.pattern.permute.xlu0 0
    %190 = vperm.xlu0 %189, %v177
    %v191 = vpop.permute.xlu0 %190
    %192 = vset.pattern.permute.xlu0 0
    %193 = vperm.xlu0 %192, %v178
    %v194 = vpop.permute.xlu0 %193
    %v195 = vlaneseq
    %v196 = vand.u32 %v195, 127
    %v197 = vperm.slane %v185, %v196
    %v198 = vperm.slane %v188, %v196
    %v199 = vperm.slane %v191, %v196
    %v200 = vperm.slane %v194, %v196
    %vm201 = vcmask 1041409
    %v202 = vsel %vm201, %v198, %v197
    %vm203 = vcmask 1042434
    %v204 = vsel %vm203, %v199, %v202
    %vm205 = vcmask 1043459
    %v206 = vsel %vm205, %v200, %v204
    %vm208 = vcmask 60416
    %v209 = vsel %vm208, %v206, -inf
    %210 = vmax.xlane.f32.xlu0 %v209
    %v211 = vpop.xlane.xlu0 %210
    %v213 = vperm.slane %v211, 0
    %v214 = vperm.slane %v211, 1
    %v215 = vperm.slane %v211, 2
    %v216 = vperm.slane %v211, 3
    %v221 = vsub.f32 %v175, %v213
    %v222 = vsub.f32 %v176, %v214
    %v223 = vsub.f32 %v177, %v215
    %v224 = vsub.f32 %v178, %v216
    %v225 = vmul.f32 %v221, 1.442695
    %v226 = vpow.pop %v225
    %v227 = vmul.f32 %v222, 1.442695
    %v228 = vpow.pop %v227
    %v229 = vmul.f32 %v223, 1.442695
    %v230 = vpow.pop %v229
    %v231 = vmul.f32 %v224, 1.442695
    %v232 = vpow.pop %v231
    %237 = vset.pattern.permute.xlu0 0
    %238 = vperm.xlu0 %237, %v226
    %v239 = vpop.permute.xlu0 %238
    %240 = vset.pattern.permute.xlu0 0
    %241 = vperm.xlu0 %240, %v228
    %v242 = vpop.permute.xlu0 %241
    %243 = vset.pattern.permute.xlu0 0
    %244 = vperm.xlu0 %243, %v230
    %v245 = vpop.permute.xlu0 %244
    %246 = vset.pattern.permute.xlu0 0
    %247 = vperm.xlu0 %246, %v232
    %v248 = vpop.permute.xlu0 %247
    %v249 = vperm.slane %v239, %v196
    %v250 = vperm.slane %v242, %v196
    %v251 = vperm.slane %v245, %v196
    %v252 = vperm.slane %v248, %v196
    %v253 = vsel %vm201, %v250, %v249
    %v254 = vsel %vm203, %v251, %v253
    %v255 = vsel %vm205, %v252, %v254
    %v257 = vsel %vm208, %v255, 0.0
    %258 = vadd.xlane.f32.xlu0 %v257
    %v259 = vpop.xlane.xlu0 %258
    %v260 = vrcp.pop %v259
    %v261 = vmul.f32 %v259, %v260
    %v262 = vsub.f32 1.0, %v261
    %v263 = vmul.f32 %v260, %v262
    %v264 = vadd.f32 %v260, %v263
    %vm265 = vweird.f32 %v259
    %vm266 = vweird.f32 %v260
    %vm267 = vmor %vm265, %vm266
    %v268 = vsel %vm267, %v260, %v264
    %v269 = vand.u32 2147483647, %v259
    %vm270 = vcmp.eq.f32.partialorder %v269, 8.507059e+37
    %v271 = vand.u32 %v259, 2147483648
    %v272 = vor.u32 1.1754944e-38, %v271
    %v273 = vsel %vm270, %v272, %v268
    %v275 = vperm.slane %v273, 0
    %v276 = vperm.slane %v273, 1
    %v277 = vperm.slane %v273, 2
    %v278 = vperm.slane %v273, 3
    %v283 = vmul.f32 %v226, %v275
    %v284 = vmul.f32 %v228, %v276
    %v285 = vmul.f32 %v230, %v277
    %v286 = vmul.f32 %v232, %v278
    %291 = vset.pattern.permute.xlu0 0
    %292 = vperm.xlu0 %291, %v283
    %v293 = vpop.permute.xlu0 %292
    %294 = vset.pattern.permute.xlu0 0
    %295 = vperm.xlu0 %294, %v284
    %v296 = vpop.permute.xlu0 %295
    %297 = vset.pattern.permute.xlu0 0
    %298 = vperm.xlu0 %297, %v285
    %v299 = vpop.permute.xlu0 %298
    %300 = vset.pattern.permute.xlu0 0
    %301 = vperm.xlu0 %300, %v286
    %v302 = vpop.permute.xlu0 %301
    %v303 = vperm.slane %v293, %v196
    %v304 = vperm.slane %v296, %v196
    %v305 = vperm.slane %v299, %v196
    %v306 = vperm.slane %v302, %v196
    %v307 = vsel %vm201, %v304, %v303
    %v308 = vsel %vm203, %v305, %v307
    %v309 = vsel %vm205, %v306, %v308
    %311 = vst.msk [vmem:[#allocation8] sm:$0xf] %vm208, %v309
    // Predicated region
    $region34: #{tpu_custom_call.1} parent=1 // pred_check
      _
    $region35: #{tpu_custom_call.1} parent=1 // pred_check_branch
      %313 = sbr.rel (0) target = $region37
    $region36: #{tpu_custom_call.1} parent=1 // pred_region
      %315 = vsyncadd [#allocation4], 0
      %s317 = sshll.u32 [#allocation8], 4
      %s318 = int_to_ptr.vmem [resolvable:$true] %s317
      %s319 = sshll.u32 %s5, 4
      %s320 = int_to_ptr.hbm [resolvable:$true] %s319
      %322 = dma.vmem_to_hbm [thread:$0]  %s318, 64, %s320, [#allocation4]
    $region37: #{tpu_custom_call.1} parent=1 // pred_fallthru
      _
    // Predicated region
    $region38: #{tpu_custom_call.1} parent=1 // pred_check
      _
    $region39: #{tpu_custom_call.1} parent=1 // pred_check_branch
      %324 = sbr.rel (0) target = $region41
    $region40: #{tpu_custom_call.1} parent=1 // pred_region
      %326 = dma.done [#allocation4], 64
    $region41: #{tpu_custom_call.1} parent=1 // pred_fallthru
      _
    %327 = vsyncpa [#allocation3], 1
    %328 = vsyncpa [#allocation6], 1
    %329 = vsyncpa [#allocation4], 1

</llo_original>
